<compile_context>
chip_gen: v5e
topology: v5e:2x2
jax: 0.10.0
libtpu: 0.0.40
codegen_flags: <defaults>
</compile_context>

<pallas_src>
import functools

import numpy as np
import jax
import jax.numpy as jnp
from jax import lax
from jax.experimental import pallas as pl
from jax.experimental.pallas import tpu as pltpu

_C = 9           # number of time bins
_CH = 32         # channel rows inside the kernel (30 used + 2 pad, multiple of 8)


def _event_feature_kernel(ev_ref, out_ref, acc_ref, *, H, W, C):
    """One (spatial-tile, event-tile) grid step.

    ev_ref  : (5, TN)   f32  rows [x, y, t_norm, p, b]   (lanes = events)
    out_ref : (CH, TSP) f32  plane-major output tile (batch folded into spatial)
    acc_ref : (CH, TSP) f32  VMEM accumulator, resident across the event axis
    """
    k = pl.program_id(1)                      # event (reduction) axis, innermost
    nk = pl.num_programs(1)
    CH, TSP = acc_ref.shape
    TN = ev_ref.shape[1]
    HW = H * W

    @pl.when(k == 0)
    def _():
        acc_ref[...] = jnp.zeros_like(acc_ref)

    x = ev_ref[0:1, :]
    y = ev_ref[1:2, :]
    tn = ev_ref[2:3, :]                       # already normalized by global t.max()
    p = ev_ref[3:4, :]
    b = ev_ref[4:5, :]

    xi = x.astype(jnp.int32)
    yi = y.astype(jnp.int32)
    pi = p.astype(jnp.int32)
    bi = b.astype(jnp.int32)

    # ---- spatial one-hot with batch folded in:  s = b*H*W + y*W + x ---------
    # Padded events carry b == B, so their flat index falls outside every
    # spatial tile and their whole S column is zero (they contribute nothing).
    sp_start = pl.program_id(0) * TSP
    spatial = bi * HW + yi * W + xi - sp_start               # (1, TN), tile-local
    iota_s = lax.broadcasted_iota(jnp.int32, (TSP, TN), 0)
    S = (iota_s == jnp.broadcast_to(spatial, (TSP, TN))).astype(jnp.float32)

    # ---- per-event channel / value rows (all (1, TN)) ------------------------
    # EST: each event touches at most the two adjacent bins i0 = floor(u), i0+1.
    u = tn * (C - 1)
    i0 = jnp.floor(u).astype(jnp.int32)
    frac = u - i0.astype(jnp.float32)
    # PyTorch ValueLayer quirk: trilinear weight is 0 (not 1) exactly at ts == 0.
    w0 = jnp.where(frac == 0.0, 0.0, 1.0 - frac)
    val0 = jnp.where((i0 >= 0) & (i0 <= C - 1), tn * w0, 0.0)
    val1 = jnp.where(i0 + 1 <= C - 1, tn * frac, 0.0)
    ch0 = pi * C + jnp.clip(i0, 0, C - 1)
    ch1 = pi * C + jnp.clip(i0 + 1, 0, C - 1)

    # VoxGrid: per-event bin j with tn in (j/C, (j+1)/C]  (cheap (1, TN) passes,
    # comparison form kept to match the reference exactly at bin boundaries).
    jvox = jnp.zeros_like(pi)
    in_any = jnp.zeros(tn.shape, jnp.bool_)
    for i in range(C):
        m = (tn > i / C) & (tn <= (i + 1) / C)
        jvox = jnp.where(m, i, jvox)
        in_any = in_any | m
    ch_vg = 2 * C + jvox                      # channels 18..26
    ch_ec = 3 * C + 1 + pi                    # channels 28, 29

    # ---- build V (CH, TN): only 5 one-hot passes ------------------------------
    iota_c = lax.broadcasted_iota(jnp.int32, (CH, TN), 0)
    bc = lambda v: jnp.broadcast_to(v, (CH, TN))
    V = jnp.where(iota_c == bc(ch0), bc(val0), 0.0)                  # EST bin i0
    V = V + jnp.where(iota_c == bc(ch1), bc(val1), 0.0)              # EST bin i0+1
    V = V + jnp.where((iota_c == bc(ch_vg)) & bc(in_any), 1.0, 0.0)  # VoxGrid
    V = V + (iota_c == 3 * C).astype(jnp.float32)                    # EventFrame (27)
    V = V + (iota_c == bc(ch_ec)).astype(jnp.float32)                # EventCount

    # ---- scatter-add on the MXU: contract the event axis ----------------------
    acc_ref[...] += lax.dot_general(V, S, (((1,), (1,)), ((), ())),
                                    preferred_element_type=jnp.float32)

    # ---- epilogue: binarize VoxGrid channels and store -------------------------
    @pl.when(k == nk - 1)
    def _():
        acc = acc_ref[...]
        row = lax.broadcasted_iota(jnp.int32, (CH, TSP), 0)
        is_vg = (row >= 2 * C) & (row < 3 * C)
        out_ref[...] = jnp.where(is_vg, (acc > 0).astype(jnp.float32), acc)


def quantization_layer_event_feature(events, dim, num_batches=None,
                                     tile_events=256, tile_spatial=None):
    """events: (N, 5) f32 with columns [x, y, t, p, b]; dim = (H, W).

    num_batches: pass the (static) batch count to avoid a device->host sync.
    tile_events: event-axis tile (rounded up to a multiple of 128).
    tile_spatial: spatial tile of B*H*W (must divide it and be a multiple of
                  128); None -> single spatial tile.
    """
    H, W = dim
    C = _C
    CH = _CH
    events = jnp.asarray(events, jnp.float32)
    N = events.shape[0]

    if num_batches is None:
        # TODO(synk): matches `int(1 + events[-1, -1].item())` but forces a
        # device->host sync; pass num_batches as a static int to avoid it.
        num_batches = int(events[-1, -1]) + 1
    B = max(int(num_batches), 1)
    HW = H * W
    SP = B * HW

    # --- tile selection --------------------------------------------------------
    TN = max(128, int(tile_events))
    TN = ((TN + 127) // 128) * 128            # lane-aligned event tile
    n_ev = max((N + TN - 1) // TN, 1)
    Npad = n_ev * TN

    TSP = SP if tile_spatial is None else int(tile_spatial)
    if TSP <= 0 or SP % TSP != 0 or (TSP != SP and TSP % 128 != 0):
        TSP = SP                              # fall back to a single spatial tile
    n_sp = SP // TSP

    # --- host-side prep: global t normalization, transpose to (5, N), pad ------
    x = events[:, 0]
    y = events[:, 1]
    t = events[:, 2]
    p = events[:, 3]
    b = events[:, 4]
    t_norm = t / jnp.max(t)                   # global max (required once N is tiled)
    ev_rows = jnp.stack([x, y, t_norm, p, b], axis=0)        # (5, N)
    pad = Npad - N
    if pad > 0:
        dead = jnp.concatenate(
            [jnp.zeros((4, pad), jnp.float32),
             jnp.full((1, pad), float(B), jnp.float32)], axis=0)   # b == B -> dead
        ev_rows = jnp.concatenate([ev_rows, dead], axis=1)   # (5, Npad)

    kernel = functools.partial(_event_feature_kernel, H=H, W=W, C=C)

    out = pl.pallas_call(
        kernel,
        out_shape=jax.ShapeDtypeStruct((CH, SP), jnp.float32),
        grid_spec=pltpu.PrefetchScalarGridSpec(
            num_scalar_prefetch=0,
            grid=(n_sp, n_ev),                # reduction (event) axis innermost
            in_specs=[pl.BlockSpec((5, TN), lambda s, k: (0, k))],
            out_specs=pl.BlockSpec((CH, TSP), lambda s, k: (0, s)),
            scratch_shapes=[pltpu.VMEM((CH, TSP), jnp.float32)],
        ),
        compiler_params=pltpu.CompilerParams(
            dimension_semantics=("parallel", "arbitrary"),
            vmem_limit_bytes=48 * 1024 * 1024),
    )(ev_rows)

    # (32, B*H*W) -> (B, 30, H, W)
    return jnp.transpose(out[:30].reshape(30, B, H, W), (1, 0, 2, 3))


def _reference_numpy(events, H, W):
    """Pure-numpy transcription of the PyTorch forward for verification."""
    C = 9
    N = events.shape[0]
    x, y, t, p, b = [events[:, i] for i in range(5)]
    B = max(int(1 + events[-1, -1]), 1)
    xi = x.astype(np.int64); yi = y.astype(np.int64)
    pi = p.astype(np.int64); bi = b.astype(np.int64)
    tn = t / t.max()
    inv = 1.0 / (C - 1)

    feat = np.zeros((B, 30, H, W), np.float32)

    # EST
    for i in range(C):
        ts = tn - i * inv
        base = np.where(ts > 0, 1.0 - (C - 1) * ts,
                        np.where(ts < 0, (C - 1) * ts + 1.0, 0.0))
        tri = np.where((ts < -inv) | (ts > inv), 0.0, base)
        val = (tn * tri).astype(np.float32)
        np.add.at(feat, (bi, pi * C + i, yi, xi), val)

    # VoxGrid
    vg = np.zeros((B, C, H, W), np.float32)
    for i in range(C):
        m = (tn > i / C) & (tn <= (i + 1) / C)
        np.add.at(vg, (bi[m], np.full(m.sum(), i, np.int64), yi[m], xi[m]), 1.0)
    feat[:, 18:27] = (vg > 0).astype(np.float32)

    # EventFrame
    np.add.at(feat, (bi, np.full(N, 27, np.int64), yi, xi), 1.0)

    # EventCount
    np.add.at(feat, (bi, 28 + pi, yi, xi), 1.0)
    return feat


if __name__ == "__main__":
    H, W = 16, 16
    B = 2
    N = 500   # not a multiple of the event tile -> exercises lane padding

    key = jax.random.PRNGKey(0)
    kx, ky, kt, kp = jax.random.split(key, 4)
    x = jax.random.randint(kx, (N,), 0, W).astype(jnp.float32)
    y = jax.random.randint(ky, (N,), 0, H).astype(jnp.float32)
    t = jax.random.uniform(kt, (N,), minval=1e-3, maxval=1.0).astype(jnp.float32)
    p = jax.random.randint(kp, (N,), 0, 2).astype(jnp.float32)
    # batch column must be sorted so events[-1, -1] == B-1 (as torch assumes)
    b = jnp.repeat(jnp.arange(B), N // B).astype(jnp.float32)
    events = jnp.stack([x, y, t, p, b], axis=1)          # (N, 5)

    out = quantization_layer_event_feature(
        events, (H, W), num_batches=B, tile_events=256, tile_spatial=256)
    out = jax.block_until_ready(out)

    ref = _reference_numpy(np.asarray(events), H, W)
    assert out.shape == (B, 30, H, W), out.shape
    np.testing.assert_allclose(np.asarray(out), ref, rtol=1e-4, atol=1e-4)
    print("KERNEL_OK")
</pallas_src>

<mosaic_0001>
module attributes {stable_mosaic.version = 11 : i64} {
  func.func @_event_feature_kernel(%arg0: i32, %arg1: i32, %arg2: memref<5x256xf32, #tpu.memory_space<vmem>>, %arg3: memref<32x256xf32, #tpu.memory_space<vmem>>, %arg4: memref<32x256xf32, #tpu.memory_space<vmem>>) attributes {dimension_semantics = [#tpu.dimension_semantics<parallel>, #tpu.dimension_semantics<arbitrary>], iteration_bounds = array<i64: 2, 2>, scalar_prefetch = 0 : i64, scratch_operands = 1 : i64, tpu.core_type = #tpu.core_type<tc>, window_params = [{transform_indices = @transform_0, window_bounds = array<i64: 5, 256>}, {transform_indices = @transform_1, window_bounds = array<i64: 32, 256>}]} {
    %c0_i32 = arith.constant 0 : i32
    %0 = arith.cmpi eq, %arg1, %c0_i32 : i32
    %1 = arith.extui %0 : i1 to i32
    %c0_i32_0 = arith.constant 0 : i32
    %2 = arith.cmpi ne, %1, %c0_i32_0 : i32
    scf.if %2 {
      %cst_53 = arith.constant 0.000000e+00 : f32
      %192 = vector.broadcast %cst_53 : f32 to vector<32x256xf32>
      %c0_54 = arith.constant 0 : index
      %c0_55 = arith.constant 0 : index
      %193 = vector.load %arg4[%c0_54, %c0_55] : memref<32x256xf32, #tpu.memory_space<vmem>>, vector<32x256xf32>
      tpu.vector_store %arg4[%c0_54, %c0_55], %192 {strides = array<i32>} : memref<32x256xf32, #tpu.memory_space<vmem>>, vector<32x256xf32>,
    } else {
    }
    %c0 = arith.constant 0 : index
    %c0_1 = arith.constant 0 : index
    %3 = vector.load %arg2[%c0, %c0_1] : memref<5x256xf32, #tpu.memory_space<vmem>>, vector<1x256xf32>
    %c1 = arith.constant 1 : index
    %c0_2 = arith.constant 0 : index
    %4 = vector.load %arg2[%c1, %c0_2] : memref<5x256xf32, #tpu.memory_space<vmem>>, vector<1x256xf32>
    %c2 = arith.constant 2 : index
    %c0_3 = arith.constant 0 : index
    %5 = vector.load %arg2[%c2, %c0_3] : memref<5x256xf32, #tpu.memory_space<vmem>>, vector<1x256xf32>
    %c3 = arith.constant 3 : index
    %c0_4 = arith.constant 0 : index
    %6 = vector.load %arg2[%c3, %c0_4] : memref<5x256xf32, #tpu.memory_space<vmem>>, vector<1x256xf32>
    %c4 = arith.constant 4 : index
    %c0_5 = arith.constant 0 : index
    %7 = vector.load %arg2[%c4, %c0_5] : memref<5x256xf32, #tpu.memory_space<vmem>>, vector<1x256xf32>
    %8 = arith.fptosi %3 : vector<1x256xf32> to vector<1x256xi32>
    %9 = arith.fptosi %4 : vector<1x256xf32> to vector<1x256xi32>
    %10 = arith.fptosi %6 : vector<1x256xf32> to vector<1x256xi32>
    %11 = arith.fptosi %7 : vector<1x256xf32> to vector<1x256xi32>
    %c256_i32 = arith.constant 256 : i32
    %12 = arith.muli %arg0, %c256_i32 : i32
    %c256_i32_6 = arith.constant 256 : i32
    %13 = vector.broadcast %c256_i32_6 : i32 to vector<1x256xi32>
    %14 = arith.muli %11, %13 : vector<1x256xi32>
    %c16_i32 = arith.constant 16 : i32
    %15 = vector.broadcast %c16_i32 : i32 to vector<1x256xi32>
    %16 = arith.muli %9, %15 : vector<1x256xi32>
    %17 = arith.addi %14, %16 : vector<1x256xi32>
    %18 = arith.addi %17, %8 : vector<1x256xi32>
    %19 = vector.broadcast %12 : i32 to vector<1x256xi32>
    %20 = arith.subi %18, %19 : vector<1x256xi32>
    %21 = tpu.iota {dimensions = array<i32: 0>} : vector<256x256xi32>
    %22 = vector.shape_cast %20 : vector<1x256xi32> to vector<1x256xi32>
    %23 = vector.broadcast %22 : vector<1x256xi32> to vector<256x256xi32>
    %24 = arith.cmpi eq, %21, %23 : vector<256x256xi32>
    %25 = arith.extui %24 : vector<256x256xi1> to vector<256x256xi32>
    %26 = arith.sitofp %25 : vector<256x256xi32> to vector<256x256xf32>
    %cst = arith.constant 8.000000e+00 : f32
    %27 = vector.broadcast %cst : f32 to vector<1x256xf32>
    %28 = arith.mulf %5, %27 : vector<1x256xf32>
    %29 = math.floor %28 : vector<1x256xf32>
    %30 = arith.fptosi %29 : vector<1x256xf32> to vector<1x256xi32>
    %31 = arith.sitofp %30 : vector<1x256xi32> to vector<1x256xf32>
    %32 = arith.subf %28, %31 : vector<1x256xf32>
    %cst_7 = arith.constant 0.000000e+00 : f32
    %33 = vector.broadcast %cst_7 : f32 to vector<1x256xf32>
    %34 = arith.cmpf oeq, %32, %33 : vector<1x256xf32>
    %cst_8 = arith.constant 1.000000e+00 : f32
    %35 = vector.broadcast %cst_8 : f32 to vector<1x256xf32>
    %36 = arith.subf %35, %32 : vector<1x256xf32>
    %cst_9 = arith.constant 0.000000e+00 : f32
    %37 = vector.broadcast %cst_9 : f32 to vector<1x256xf32>
    %38 = arith.select %34, %37, %36 : vector<1x256xi1>, vector<1x256xf32>
    %c0_i32_10 = arith.constant 0 : i32
    %39 = vector.broadcast %c0_i32_10 : i32 to vector<1x256xi32>
    %40 = arith.cmpi sge, %30, %39 : vector<1x256xi32>
    %c8_i32 = arith.constant 8 : i32
    %41 = vector.broadcast %c8_i32 : i32 to vector<1x256xi32>
    %42 = arith.cmpi sle, %30, %41 : vector<1x256xi32>
    %43 = arith.andi %40, %42 : vector<1x256xi1>
    %44 = arith.mulf %5, %38 : vector<1x256xf32>
    %cst_11 = arith.constant 0.000000e+00 : f32
    %45 = vector.broadcast %cst_11 : f32 to vector<1x256xf32>
    %46 = arith.select %43, %44, %45 : vector<1x256xi1>, vector<1x256xf32>
    %c1_i32 = arith.constant 1 : i32
    %47 = vector.broadcast %c1_i32 : i32 to vector<1x256xi32>
    %48 = arith.addi %30, %47 : vector<1x256xi32>
    %c8_i32_12 = arith.constant 8 : i32
    %49 = vector.broadcast %c8_i32_12 : i32 to vector<1x256xi32>
    %50 = arith.cmpi sle, %48, %49 : vector<1x256xi32>
    %51 = arith.mulf %5, %32 : vector<1x256xf32>
    %cst_13 = arith.constant 0.000000e+00 : f32
    %52 = vector.broadcast %cst_13 : f32 to vector<1x256xf32>
    %53 = arith.select %50, %51, %52 : vector<1x256xi1>, vector<1x256xf32>
    %c9_i32 = arith.constant 9 : i32
    %54 = vector.broadcast %c9_i32 : i32 to vector<1x256xi32>
    %55 = arith.muli %10, %54 : vector<1x256xi32>
    %c0_i32_14 = arith.constant 0 : i32
    %c8_i32_15 = arith.constant 8 : i32
    %56 = vector.broadcast %c0_i32_14 : i32 to vector<1x256xi32>
    %57 = arith.maxsi %56, %30 : vector<1x256xi32>
    %58 = vector.broadcast %c8_i32_15 : i32 to vector<1x256xi32>
    %59 = arith.minsi %58, %57 : vector<1x256xi32>
    %60 = arith.addi %55, %59 : vector<1x256xi32>
    %c9_i32_16 = arith.constant 9 : i32
    %61 = vector.broadcast %c9_i32_16 : i32 to vector<1x256xi32>
    %62 = arith.muli %10, %61 : vector<1x256xi32>
    %c1_i32_17 = arith.constant 1 : i32
    %63 = vector.broadcast %c1_i32_17 : i32 to vector<1x256xi32>
    %64 = arith.addi %30, %63 : vector<1x256xi32>
    %c0_i32_18 = arith.constant 0 : i32
    %c8_i32_19 = arith.constant 8 : i32
    %65 = vector.broadcast %c0_i32_18 : i32 to vector<1x256xi32>
    %66 = arith.maxsi %65, %64 : vector<1x256xi32>
    %67 = vector.broadcast %c8_i32_19 : i32 to vector<1x256xi32>
    %68 = arith.minsi %67, %66 : vector<1x256xi32>
    %69 = arith.addi %62, %68 : vector<1x256xi32>
    %c0_i32_20 = arith.constant 0 : i32
    %70 = vector.broadcast %c0_i32_20 : i32 to vector<1x256xi32>
    %false = arith.constant false
    %71 = vector.broadcast %false : i1 to vector<1x256xi1>
    %cst_21 = arith.constant 0.000000e+00 : f32
    %72 = vector.broadcast %cst_21 : f32 to vector<1x256xf32>
    %73 = arith.cmpf ogt, %5, %72 : vector<1x256xf32>
    %cst_22 = arith.constant 0.111111112 : f32
    %74 = vector.broadcast %cst_22 : f32 to vector<1x256xf32>
    %75 = arith.cmpf ole, %5, %74 : vector<1x256xf32>
    %76 = arith.andi %73, %75 : vector<1x256xi1>
    %c0_i32_23 = arith.constant 0 : i32
    %77 = vector.broadcast %c0_i32_23 : i32 to vector<1x256xi32>
    %78 = arith.select %76, %77, %70 : vector<1x256xi1>, vector<1x256xi32>
    %79 = arith.ori %71, %76 : vector<1x256xi1>
    %cst_24 = arith.constant 0.111111112 : f32
    %80 = vector.broadcast %cst_24 : f32 to vector<1x256xf32>
    %81 = arith.cmpf ogt, %5, %80 : vector<1x256xf32>
    %cst_25 = arith.constant 0.222222224 : f32
    %82 = vector.broadcast %cst_25 : f32 to vector<1x256xf32>
    %83 = arith.cmpf ole, %5, %82 : vector<1x256xf32>
    %84 = arith.andi %81, %83 : vector<1x256xi1>
    %c1_i32_26 = arith.constant 1 : i32
    %85 = vector.broadcast %c1_i32_26 : i32 to vector<1x256xi32>
    %86 = arith.select %84, %85, %78 : vector<1x256xi1>, vector<1x256xi32>
    %87 = arith.ori %79, %84 : vector<1x256xi1>
    %cst_27 = arith.constant 0.222222224 : f32
    %88 = vector.broadcast %cst_27 : f32 to vector<1x256xf32>
    %89 = arith.cmpf ogt, %5, %88 : vector<1x256xf32>
    %cst_28 = arith.constant 0.333333343 : f32
    %90 = vector.broadcast %cst_28 : f32 to vector<1x256xf32>
    %91 = arith.cmpf ole, %5, %90 : vector<1x256xf32>
    %92 = arith.andi %89, %91 : vector<1x256xi1>
    %c2_i32 = arith.constant 2 : i32
    %93 = vector.broadcast %c2_i32 : i32 to vector<1x256xi32>
    %94 = arith.select %92, %93, %86 : vector<1x256xi1>, vector<1x256xi32>
    %95 = arith.ori %87, %92 : vector<1x256xi1>
    %cst_29 = arith.constant 0.333333343 : f32
    %96 = vector.broadcast %cst_29 : f32 to vector<1x256xf32>
    %97 = arith.cmpf ogt, %5, %96 : vector<1x256xf32>
    %cst_30 = arith.constant 0.444444448 : f32
    %98 = vector.broadcast %cst_30 : f32 to vector<1x256xf32>
    %99 = arith.cmpf ole, %5, %98 : vector<1x256xf32>
    %100 = arith.andi %97, %99 : vector<1x256xi1>
    %c3_i32 = arith.constant 3 : i32
    %101 = vector.broadcast %c3_i32 : i32 to vector<1x256xi32>
    %102 = arith.select %100, %101, %94 : vector<1x256xi1>, vector<1x256xi32>
    %103 = arith.ori %95, %100 : vector<1x256xi1>
    %cst_31 = arith.constant 0.444444448 : f32
    %104 = vector.broadcast %cst_31 : f32 to vector<1x256xf32>
    %105 = arith.cmpf ogt, %5, %104 : vector<1x256xf32>
    %cst_32 = arith.constant 0.555555582 : f32
    %106 = vector.broadcast %cst_32 : f32 to vector<1x256xf32>
    %107 = arith.cmpf ole, %5, %106 : vector<1x256xf32>
    %108 = arith.andi %105, %107 : vector<1x256xi1>
    %c4_i32 = arith.constant 4 : i32
    %109 = vector.broadcast %c4_i32 : i32 to vector<1x256xi32>
    %110 = arith.select %108, %109, %102 : vector<1x256xi1>, vector<1x256xi32>
    %111 = arith.ori %103, %108 : vector<1x256xi1>
    %cst_33 = arith.constant 0.555555582 : f32
    %112 = vector.broadcast %cst_33 : f32 to vector<1x256xf32>
    %113 = arith.cmpf ogt, %5, %112 : vector<1x256xf32>
    %cst_34 = arith.constant 0.666666686 : f32
    %114 = vector.broadcast %cst_34 : f32 to vector<1x256xf32>
    %115 = arith.cmpf ole, %5, %114 : vector<1x256xf32>
    %116 = arith.andi %113, %115 : vector<1x256xi1>
    %c5_i32 = arith.constant 5 : i32
    %117 = vector.broadcast %c5_i32 : i32 to vector<1x256xi32>
    %118 = arith.select %116, %117, %110 : vector<1x256xi1>, vector<1x256xi32>
    %119 = arith.ori %111, %116 : vector<1x256xi1>
    %cst_35 = arith.constant 0.666666686 : f32
    %120 = vector.broadcast %cst_35 : f32 to vector<1x256xf32>
    %121 = arith.cmpf ogt, %5, %120 : vector<1x256xf32>
    %cst_36 = arith.constant 0.777777791 : f32
    %122 = vector.broadcast %cst_36 : f32 to vector<1x256xf32>
    %123 = arith.cmpf ole, %5, %122 : vector<1x256xf32>
    %124 = arith.andi %121, %123 : vector<1x256xi1>
    %c6_i32 = arith.constant 6 : i32
    %125 = vector.broadcast %c6_i32 : i32 to vector<1x256xi32>
    %126 = arith.select %124, %125, %118 : vector<1x256xi1>, vector<1x256xi32>
    %127 = arith.ori %119, %124 : vector<1x256xi1>
    %cst_37 = arith.constant 0.777777791 : f32
    %128 = vector.broadcast %cst_37 : f32 to vector<1x256xf32>
    %129 = arith.cmpf ogt, %5, %128 : vector<1x256xf32>
    %cst_38 = arith.constant 0.888888895 : f32
    %130 = vector.broadcast %cst_38 : f32 to vector<1x256xf32>
    %131 = arith.cmpf ole, %5, %130 : vector<1x256xf32>
    %132 = arith.andi %129, %131 : vector<1x256xi1>
    %c7_i32 = arith.constant 7 : i32
    %133 = vector.broadcast %c7_i32 : i32 to vector<1x256xi32>
    %134 = arith.select %132, %133, %126 : vector<1x256xi1>, vector<1x256xi32>
    %135 = arith.ori %127, %132 : vector<1x256xi1>
    %cst_39 = arith.constant 0.888888895 : f32
    %136 = vector.broadcast %cst_39 : f32 to vector<1x256xf32>
    %137 = arith.cmpf ogt, %5, %136 : vector<1x256xf32>
    %cst_40 = arith.constant 1.000000e+00 : f32
    %138 = vector.broadcast %cst_40 : f32 to vector<1x256xf32>
    %139 = arith.cmpf ole, %5, %138 : vector<1x256xf32>
    %140 = arith.andi %137, %139 : vector<1x256xi1>
    %c8_i32_41 = arith.constant 8 : i32
    %141 = vector.broadcast %c8_i32_41 : i32 to vector<1x256xi32>
    %142 = arith.select %140, %141, %134 : vector<1x256xi1>, vector<1x256xi32>
    %143 = arith.ori %135, %140 : vector<1x256xi1>
    %c18_i32 = arith.constant 18 : i32
    %144 = vector.broadcast %c18_i32 : i32 to vector<1x256xi32>
    %145 = arith.addi %144, %142 : vector<1x256xi32>
    %c28_i32 = arith.constant 28 : i32
    %146 = vector.broadcast %c28_i32 : i32 to vector<1x256xi32>
    %147 = arith.addi %146, %10 : vector<1x256xi32>
    %148 = tpu.iota {dimensions = array<i32: 0>} : vector<32x256xi32>
    %149 = vector.shape_cast %60 : vector<1x256xi32> to vector<1x256xi32>
    %150 = vector.broadcast %149 : vector<1x256xi32> to vector<32x256xi32>
    %151 = arith.cmpi eq, %148, %150 : vector<32x256xi32>
    %152 = vector.shape_cast %46 : vector<1x256xf32> to vector<1x256xf32>
    %153 = vector.broadcast %152 : vector<1x256xf32> to vector<32x256xf32>
    %cst_42 = arith.constant 0.000000e+00 : f32
    %154 = vector.broadcast %cst_42 : f32 to vector<32x256xf32>
    %155 = arith.select %151, %153, %154 : vector<32x256xi1>, vector<32x256xf32>
    %156 = vector.shape_cast %69 : vector<1x256xi32> to vector<1x256xi32>
    %157 = vector.broadcast %156 : vector<1x256xi32> to vector<32x256xi32>
    %158 = arith.cmpi eq, %148, %157 : vector<32x256xi32>
    %159 = vector.shape_cast %53 : vector<1x256xf32> to vector<1x256xf32>
    %160 = vector.broadcast %159 : vector<1x256xf32> to vector<32x256xf32>
    %cst_43 = arith.constant 0.000000e+00 : f32
    %161 = vector.broadcast %cst_43 : f32 to vector<32x256xf32>
    %162 = arith.select %158, %160, %161 : vector<32x256xi1>, vector<32x256xf32>
    %163 = arith.addf %155, %162 : vector<32x256xf32>
    %164 = vector.shape_cast %145 : vector<1x256xi32> to vector<1x256xi32>
    %165 = vector.broadcast %164 : vector<1x256xi32> to vector<32x256xi32>
    %166 = arith.cmpi eq, %148, %165 : vector<32x256xi32>
    %167 = vector.shape_cast %143 : vector<1x256xi1> to vector<1x256xi1>
    %168 = vector.broadcast %167 : vector<1x256xi1> to vector<32x256xi1>
    %169 = arith.andi %166, %168 : vector<32x256xi1>
    %cst_44 = arith.constant 1.000000e+00 : f32
    %cst_45 = arith.constant 0.000000e+00 : f32
    %170 = vector.broadcast %cst_44 : f32 to vector<32x256xf32>
    %171 = vector.broadcast %cst_45 : f32 to vector<32x256xf32>
    %172 = arith.select %169, %170, %171 : vector<32x256xi1>, vector<32x256xf32>
    %173 = arith.addf %163, %172 : vector<32x256xf32>
    %c27_i32 = arith.constant 27 : i32
    %174 = vector.broadcast %c27_i32 : i32 to vector<32x256xi32>
    %175 = arith.cmpi eq, %148, %174 : vector<32x256xi32>
    %176 = arith.extui %175 : vector<32x256xi1> to vector<32x256xi32>
    %177 = arith.sitofp %176 : vector<32x256xi32> to vector<32x256xf32>
    %178 = arith.addf %173, %177 : vector<32x256xf32>
    %179 = vector.shape_cast %147 : vector<1x256xi32> to vector<1x256xi32>
    %180 = vector.broadcast %179 : vector<1x256xi32> to vector<32x256xi32>
    %181 = arith.cmpi eq, %148, %180 : vector<32x256xi32>
    %182 = arith.extui %181 : vector<32x256xi1> to vector<32x256xi32>
    %183 = arith.sitofp %182 : vector<32x256xi32> to vector<32x256xf32>
    %184 = arith.addf %178, %183 : vector<32x256xf32>
    %c0_46 = arith.constant 0 : index
    %c0_47 = arith.constant 0 : index
    %185 = vector.load %arg4[%c0_46, %c0_47] : memref<32x256xf32, #tpu.memory_space<vmem>>, vector<32x256xf32>
    %cst_48 = arith.constant dense<0.000000e+00> : vector<32x256xf32>
    %186 = tpu.matmul %184, %26, %cst_48 {dimension_numbers = #tpu.dot_dimension_numbers<[1], [1], [0], [0], [0, 0, 1, 0], [], []>} : vector<32x256xf32>, vector<256x256xf32>, vector<32x256xf32> -> vector<32x256xf32>
    %187 = arith.addf %185, %186 : vector<32x256xf32>
    %c0_49 = arith.constant 0 : index
    %c0_50 = arith.constant 0 : index
    %188 = vector.load %arg4[%c0_49, %c0_50] : memref<32x256xf32, #tpu.memory_space<vmem>>, vector<32x256xf32>
    tpu.vector_store %arg4[%c0_49, %c0_50], %187 {strides = array<i32>} : memref<32x256xf32, #tpu.memory_space<vmem>>, vector<32x256xf32>,
    %c1_i32_51 = arith.constant 1 : i32
    %189 = arith.cmpi eq, %arg1, %c1_i32_51 : i32
    %190 = arith.extui %189 : i1 to i32
    %c0_i32_52 = arith.constant 0 : i32
    %191 = arith.cmpi ne, %190, %c0_i32_52 : i32
    scf.if %191 {
      %c0_53 = arith.constant 0 : index
      %c0_54 = arith.constant 0 : index
      %192 = vector.load %arg4[%c0_53, %c0_54] : memref<32x256xf32, #tpu.memory_space<vmem>>, vector<32x256xf32>
      %193 = tpu.iota {dimensions = array<i32: 0>} : vector<32x256xi32>
      %c18_i32_55 = arith.constant 18 : i32
      %194 = vector.broadcast %c18_i32_55 : i32 to vector<32x256xi32>
      %195 = arith.cmpi sge, %193, %194 : vector<32x256xi32>
      %c27_i32_56 = arith.constant 27 : i32
      %196 = vector.broadcast %c27_i32_56 : i32 to vector<32x256xi32>
      %197 = arith.cmpi slt, %193, %196 : vector<32x256xi32>
      %198 = arith.andi %195, %197 : vector<32x256xi1>
      %cst_57 = arith.constant 0.000000e+00 : f32
      %199 = vector.broadcast %cst_57 : f32 to vector<32x256xf32>
      %200 = arith.cmpf ogt, %192, %199 : vector<32x256xf32>
      %201 = arith.extui %200 : vector<32x256xi1> to vector<32x256xi32>
      %202 = arith.sitofp %201 : vector<32x256xi32> to vector<32x256xf32>
      %203 = arith.select %198, %202, %192 : vector<32x256xi1>, vector<32x256xf32>
      %c0_58 = arith.constant 0 : index
      %c0_59 = arith.constant 0 : index
      %204 = vector.load %arg3[%c0_58, %c0_59] : memref<32x256xf32, #tpu.memory_space<vmem>>, vector<32x256xf32>
      tpu.vector_store %arg3[%c0_58, %c0_59], %203 {strides = array<i32>} : memref<32x256xf32, #tpu.memory_space<vmem>>, vector<32x256xf32>,
    } else {
    }
    return
  }
  func.func @transform_0(%arg0: i32, %arg1: i32) -> (i32, i32) {
    %c0_i32 = arith.constant 0 : i32
    %c0_i32_0 = arith.constant 0 : i32
    return %c0_i32, %arg1 : i32, i32
  }
  func.func @transform_1(%arg0: i32, %arg1: i32) -> (i32, i32) {
    %c0_i32 = arith.constant 0 : i32
    %c0_i32_0 = arith.constant 0 : i32
    return %c0_i32, %arg0 : i32, i32
  }
}

</mosaic_0001>

<llo_original>
// kernel: tpu_custom_call.1
$region0: #{tpu_custom_call.1}
  #allocation0 [shape = 'u32[]', space=smem, size = 0x4, offset = 0x4, fixed_abs, tag = 'smem constant byte address 0x4 - core index']
  #allocation1 [shape = 'u32[72,128]{1,0:T(1,128)}', space=vmem, size = 0x9000, scoped, tag = 'internal scratch']
  #allocation2 [shape = 'f32[32,256]{1,0:T(8,128)}', space=vmem, size = 0x8000, scoped, tag = 'scratch operand']
  %s0 = inlined_call_operand.hbm [shape: f32[5,512], index: 0, kind: input, shape index: {}]
  %s1 = inlined_call_operand.hbm [shape: f32[32,512], index: 1, kind: output, shape index: {}]
  %s2 = sld [smem:[#allocation0]]
  $region49: #{tpu_custom_call.1} parent=0
    _
  %s4 = ssub.s32 1, %s2
  %s5 = scalar_select 0, %s4, %s2
  $region1: #{tpu_custom_call.1} parent=0
    #allocation3 [shape = 'u8[16384]{0}', space=vmem, size = 0x4000, scoped, tag = 'input window, operand 0']
    #allocation4 [shape = 's32[2]{0}', space=sflag, size = 0x8, scoped, tag = 'scoped memory for tpu_custom_call.1']
    #allocation5 [shape = 's32[2]{0}', space=sflag, size = 0x8, scoped, tag = 'scoped memory for tpu_custom_call.1']
    #allocation6 [shape = 'u8[65536]{0}', space=vmem, size = 0x10000, scoped, tag = 'output window, operand 0']
    %6 = vsyncpa [#allocation4], 0
    %s7 = scalar_lea.sflag [#allocation4], 1
    %8 = vsyncpa %s7, 0
    %9 = vsyncpa [#allocation5], 0
    %s10 = scalar_lea.sflag [#allocation5], 1
    %11 = vsyncpa %s10, 0
    loop: start=0, step=1, limit=6
    $region2: #{tpu_custom_call.1} parent=1 // loop_pre_header
      _
    $region3: #{tpu_custom_call.1} parent=1 // loop_header
      %s13 = sphi 0, %s17
      %p14 = scmp.ge.s32.totalorder %s13, 6
      %s20 = sphi 0, %s32
      %s21 = sphi 0, %s28
      %s22 = sphi 0, %s20
      %s23 = sphi 0, %s21
      %s24 = sphi 0, %s22
      %s25 = sphi 0, %s23
      %s35 = sphi 0, %s37
      %s38 = sphi 0, %s35
      %s39 = sphi 0, %s38
      %s55 = sphi 0, %s39
      %s61 = sphi 0, %s63
      %s64 = sphi 0, %s61
      %s65 = sphi 0, %s64
      %s81 = sphi 0, %s65
    $region4: #{tpu_custom_call.1} parent=1 // loop_header_branch
      %16 = sbr.rel (%p14) target = $region8
    $region5: #{tpu_custom_call.1} parent=1 // loop_body
      %s18 = ssub.s32 %s13, 1
      %s19 = ssub.s32 %s13, 2
      %s26 = sadd.s32 1, %s21
      %p27 = scmp.ge.s32.totalorder %s26, 2
      %s28 = scalar_select %p27, 0, %s26
      %s29 = sadd.s32 1, %s20
      %s30 = scalar_select %p27, %s29, %s20
      %p31 = scmp.ge.s32.totalorder %s30, 2
      %s32 = scalar_select %p31, 0, %s30
      %s33 = ssub.s32 %s21, %s28
      %p34 = scmp.eq.s32.totalorder %s33, 0
      %s36 = sadd.s32 %s35, 1
      %s37 = scalar_select %p34, %s35, %s36
      %p40 = pneg %p34
      %p41 = scmp.eq.s32.totalorder %s13, 3
      %p42 = por %p40, %p41
      %p43 = scmp.ne.s32.totalorder %s35, %s38
      %p44 = scmp.eq.s32.totalorder %s13, 0
      %p45 = por %p43, %p44
      %p46 = scmp.ne.s32.totalorder %s35, %s38
      %p47 = scmp.eq.s32.totalorder %s18, 3
      %p48 = por %p46, %p47
      %p49 = scmp.ne.s32.totalorder %s38, %s39
      %p50 = scmp.eq.s32.totalorder %s18, 0
      %p51 = por %p49, %p50
      %p52 = scmp.ne.s32.totalorder %s38, %s39
      %p53 = scmp.eq.s32.totalorder %s19, 3
      %p54 = por %p52, %p53
      %p56 = scmp.ne.s32.totalorder %s39, %s55
      %p57 = scmp.eq.s32.totalorder %s19, 0
      %p58 = por %p56, %p57
      %s59 = ssub.s32 %s20, %s32
      %p60 = scmp.eq.s32.totalorder %s59, 0
      %s62 = sadd.s32 %s61, 1
      %s63 = scalar_select %p60, %s61, %s62
      %p66 = pneg %p60
      %p67 = scmp.eq.s32.totalorder %s13, 3
      %p68 = por %p66, %p67
      %p69 = scmp.ne.s32.totalorder %s61, %s64
      %p70 = scmp.eq.s32.totalorder %s13, 0
      %p71 = por %p69, %p70
      %p72 = scmp.ne.s32.totalorder %s61, %s64
      %p73 = scmp.eq.s32.totalorder %s18, 3
      %p74 = por %p72, %p73
      %p75 = scmp.ne.s32.totalorder %s64, %s65
      %p76 = scmp.eq.s32.totalorder %s18, 0
      %p77 = por %p75, %p76
      %p78 = scmp.ne.s32.totalorder %s64, %s65
      %p79 = scmp.eq.s32.totalorder %s19, 3
      %p80 = por %p78, %p79
      %p82 = scmp.ne.s32.totalorder %s65, %s81
      %p83 = scmp.eq.s32.totalorder %s19, 0
      %p84 = por %p82, %p83
      %p85 = scmp.le.s32.totalorder 1, %s13
      %p86 = scmp.lt.s32.totalorder %s13, 5
      %p87 = pnand %p85, %p86
      %p88 = pneg %p87
      // Predicated region
      $region9: #{tpu_custom_call.1} parent=5 // pred_check
        _
      $region10: #{tpu_custom_call.1} parent=5 // pred_check_branch
        %90 = sbr.rel (%p87) target = $region12
      $region11: #{tpu_custom_call.1} parent=5 // pred_region
        %s91 = ssub.s32 %s13, 1
      $region12: #{tpu_custom_call.1} parent=5 // pred_fallthru
        _
      %p92 = scmp.lt.s32.totalorder %s13, 4
      // Predicated region
      $region13: #{tpu_custom_call.1} parent=5 // pred_check
        %p93 = pneg %p92
      $region14: #{tpu_custom_call.1} parent=5 // pred_check_branch
        %95 = sbr.rel (%p93) target = $region16
      $region15: #{tpu_custom_call.1} parent=5 // pred_region
        // Predicated region
        $region17: #{tpu_custom_call.1} parent=15 // pred_check
          %p96 = pneg %p45
        $region18: #{tpu_custom_call.1} parent=15 // pred_check_branch
          %98 = sbr.rel (%p96) target = $region20
        $region19: #{tpu_custom_call.1} parent=15 // pred_region
          %s99 = sand.u32 %s35, 1
          %s100 = scalar_lea.sflag [#allocation4], %s99
          %s101 = sand.u32 %s35, 1
          %s102 = smul.addr %s101, 16
          %s103 = scalar_lea.vmem [#allocation3], %s102
          %s104 = smul.u32 2, %s21
          %106 = vsyncadd %s100, 0
          %s107 = smul.addr %s104, 8
          %s108 = scalar_lea.hbm %s0, %s107
          %s110 = sshll.u32 %s108, 4
          %s111 = int_to_ptr.hbm [resolvable:$true] %s110
          %s112 = sshll.u32 %s103, 4
          %s113 = int_to_ptr.vmem [resolvable:$true] %s112
          %115 = dma.hbm_to_vmem [thread:$0]  %s111, 256, %s113, %s100
        $region20: #{tpu_custom_call.1} parent=15 // pred_fallthru
          _
      $region16: #{tpu_custom_call.1} parent=5 // pred_fallthru
        _
      %p116 = scmp.le.s32.totalorder 1, %s13
      %p117 = scmp.lt.s32.totalorder %s13, 5
      %p118 = pnand %p116, %p117
      %p119 = pneg %p118
      // Predicated region
      $region21: #{tpu_custom_call.1} parent=5 // pred_check
        _
      $region22: #{tpu_custom_call.1} parent=5 // pred_check_branch
        %121 = sbr.rel (%p118) target = $region24
      $region23: #{tpu_custom_call.1} parent=5 // pred_region
        %s122 = ssub.s32 %s13, 1
        %s123 = sand.u32 %s38, 1
        %s124 = scalar_lea.sflag [#allocation4], %s123
        %s125 = sand.u32 %s38, 1
        %s126 = smul.addr %s125, 16
        %s127 = scalar_lea.vmem [#allocation3], %s126
        // Predicated region
        $region25: #{tpu_custom_call.1} parent=23 // pred_check
          %p128 = pneg %p51
        $region26: #{tpu_custom_call.1} parent=23 // pred_check_branch
          %130 = sbr.rel (%p128) target = $region28
        $region27: #{tpu_custom_call.1} parent=23 // pred_region
          %132 = dma.done %s124, 256
        $region28: #{tpu_custom_call.1} parent=23 // pred_fallthru
          _
        %s133 = sand.u32 %s38, 1
        %s134 = scalar_lea.sflag [#allocation4], %s133
        %s135 = sand.u32 %s38, 1
        %s136 = smul.addr %s135, 16
        %s137 = scalar_lea.vmem [#allocation3], %s136
        %p138 = pneg %p51
        %p139 = pneg %p48
        %p140 = pneg %p77
        %p141 = pneg %p74
        %s142 = sand.u32 %s64, 1
        %s143 = scalar_lea.sflag [#allocation5], %s142
        %s144 = sand.u32 %s64, 1
        %s145 = smul.addr %s144, 64
        %s146 = scalar_lea.vmem [#allocation6], %s145
        %s147 = smul.u32 2, %s23
        %s148 = smul.u32 2, %s22
        %p149 = scmp.eq.s32.totalorder %s23, 0
        // Predicated region
        $region29: #{tpu_custom_call.1} parent=23 // pred_check
          %p150 = pneg %p149
        $region30: #{tpu_custom_call.1} parent=23 // pred_check_branch
          %152 = sbr.rel (%p150) target = $region32
        $region31: #{tpu_custom_call.1} parent=23 // pred_region
          %153 = vst [vmem:[#allocation2] sm:$0xff] 0.0
          %154 = vst [vmem:[#allocation2 + $0x8] sm:$0xff] 0.0
          %155 = vst [vmem:[#allocation2 + $0x10] sm:$0xff] 0.0
          %156 = vst [vmem:[#allocation2 + $0x18] sm:$0xff] 0.0
          %157 = vst [vmem:[#allocation2 + $0x20] sm:$0xff] 0.0
          %158 = vst [vmem:[#allocation2 + $0x28] sm:$0xff] 0.0
          %159 = vst [vmem:[#allocation2 + $0x30] sm:$0xff] 0.0
          %160 = vst [vmem:[#allocation2 + $0x38] sm:$0xff] 0.0
        $region32: #{tpu_custom_call.1} parent=23 // pred_fallthru
          _
        %v161 = vld [vmem:[%s127] ss:$8 sm:$0x3]
        %s162 = scalar_lea.vmem %s127, 1 [#allocation3]
        %v163 = vld [vmem:[%s162] ss:$8 sm:$0x3]
        %s164 = scalar_lea.vmem %s127, 2 [#allocation3]
        %v165 = vld [vmem:[%s164] ss:$8 sm:$0x3]
        %s166 = scalar_lea.vmem %s127, 3 [#allocation3]
        %v167 = vld [vmem:[%s166] ss:$8 sm:$0x3]
        %s168 = scalar_lea.vmem %s127, 4 [#allocation3]
        %v169 = vld [vmem:[%s168] ss:$8 sm:$0x3]
        %v170 = vcvt.f32.s32.to.zero.pseudo %v161
        %v171 = vcvt.f32.s32.to.zero.pseudo %v163
        %v172 = vcvt.f32.s32.to.zero.pseudo %v167
        %v173 = vcvt.f32.s32.to.zero.pseudo %v169
        %s174 = smul.u32 %s22, 256
        %v175 = vmul.u32 %v173, 256
        %v176 = vmul.u32 %v171, 16
        %v177 = vadd.s32 %v175, %v176
        %v178 = vadd.s32 %v177, %v170
        %v179 = vstv %s174
        %v180 = vsub.s32 %v178, %v179
        %v181 = vlaneseq
        %v182 = vshrl.u32 %v181, 7
        %v183 = vadd.s32 %v182, 8
        %v184 = vadd.s32 %v182, 16
        %v185 = vadd.s32 %v182, 24
        %v186 = vadd.s32 %v182, 32
        %v187 = vadd.s32 %v182, 40
        %v188 = vadd.s32 %v182, 48
        %v189 = vadd.s32 %v182, 56
        %v190 = vadd.s32 %v182, 64
        %v191 = vadd.s32 %v182, 72
        %v192 = vadd.s32 %v182, 80
        %v193 = vadd.s32 %v182, 88
        %v194 = vadd.s32 %v182, 96
        %v195 = vadd.s32 %v182, 104
        %v196 = vadd.s32 %v182, 112
        %v197 = vadd.s32 %v182, 120
        %v198 = vadd.s32 %v182, 128
        %v199 = vadd.s32 %v182, 136
        %v200 = vadd.s32 %v182, 144
        %v201 = vadd.s32 %v182, 152
        %v202 = vadd.s32 %v182, 160
        %v203 = vadd.s32 %v182, 168
        %v204 = vadd.s32 %v182, 176
        %v205 = vadd.s32 %v182, 184
        %v206 = vadd.s32 %v182, 192
        %v207 = vadd.s32 %v182, 200
        %v208 = vadd.s32 %v182, 208
        %v209 = vadd.s32 %v182, 216
        %v210 = vadd.s32 %v182, 224
        %v211 = vadd.s32 %v182, 232
        %v212 = vadd.s32 %v182, 240
        %v213 = vadd.s32 %v182, 248
        %v214 = vperm.slane %v180, 0
        %v215 = vperm.slane %v180, 1
        %vm216 = vcmp.eq.s32.totalorder %v182, %v214
        %vm217 = vcmp.eq.s32.totalorder %v182, %v215
        %vm218 = vcmp.eq.s32.totalorder %v183, %v214
        %vm219 = vcmp.eq.s32.totalorder %v183, %v215
        %vm220 = vcmp.eq.s32.totalorder %v184, %v214
        %vm221 = vcmp.eq.s32.totalorder %v184, %v215
        %vm222 = vcmp.eq.s32.totalorder %v185, %v214
        %vm223 = vcmp.eq.s32.totalorder %v185, %v215
        %vm224 = vcmp.eq.s32.totalorder %v186, %v214
        %vm225 = vcmp.eq.s32.totalorder %v186, %v215
        %vm226 = vcmp.eq.s32.totalorder %v187, %v214
        %vm227 = vcmp.eq.s32.totalorder %v187, %v215
        %vm228 = vcmp.eq.s32.totalorder %v188, %v214
        %vm229 = vcmp.eq.s32.totalorder %v188, %v215
        %vm230 = vcmp.eq.s32.totalorder %v189, %v214
        %vm231 = vcmp.eq.s32.totalorder %v189, %v215
        %vm232 = vcmp.eq.s32.totalorder %v190, %v214
        %vm233 = vcmp.eq.s32.totalorder %v190, %v215
        %vm234 = vcmp.eq.s32.totalorder %v191, %v214
        %vm235 = vcmp.eq.s32.totalorder %v191, %v215
        %vm236 = vcmp.eq.s32.totalorder %v192, %v214
        %vm237 = vcmp.eq.s32.totalorder %v192, %v215
        %vm238 = vcmp.eq.s32.totalorder %v193, %v214
        %vm239 = vcmp.eq.s32.totalorder %v193, %v215
        %vm240 = vcmp.eq.s32.totalorder %v194, %v214
        %vm241 = vcmp.eq.s32.totalorder %v194, %v215
        %vm242 = vcmp.eq.s32.totalorder %v195, %v214
        %vm243 = vcmp.eq.s32.totalorder %v195, %v215
        %vm244 = vcmp.eq.s32.totalorder %v196, %v214
        %vm245 = vcmp.eq.s32.totalorder %v196, %v215
        %vm246 = vcmp.eq.s32.totalorder %v197, %v214
        %vm247 = vcmp.eq.s32.totalorder %v197, %v215
        %vm248 = vcmp.eq.s32.totalorder %v198, %v214
        %vm249 = vcmp.eq.s32.totalorder %v198, %v215
        %vm250 = vcmp.eq.s32.totalorder %v199, %v214
        %vm251 = vcmp.eq.s32.totalorder %v199, %v215
        %vm252 = vcmp.eq.s32.totalorder %v200, %v214
        %vm253 = vcmp.eq.s32.totalorder %v200, %v215
        %vm254 = vcmp.eq.s32.totalorder %v201, %v214
        %vm255 = vcmp.eq.s32.totalorder %v201, %v215
        %vm256 = vcmp.eq.s32.totalorder %v202, %v214
        %vm257 = vcmp.eq.s32.totalorder %v202, %v215
        %vm258 = vcmp.eq.s32.totalorder %v203, %v214
        %vm259 = vcmp.eq.s32.totalorder %v203, %v215
        %vm260 = vcmp.eq.s32.totalorder %v204, %v214
        %vm261 = vcmp.eq.s32.totalorder %v204, %v215
        %vm262 = vcmp.eq.s32.totalorder %v205, %v214
        %vm263 = vcmp.eq.s32.totalorder %v205, %v215
        %vm264 = vcmp.eq.s32.totalorder %v206, %v214
        %vm265 = vcmp.eq.s32.totalorder %v206, %v215
        %vm266 = vcmp.eq.s32.totalorder %v207, %v214
        %vm267 = vcmp.eq.s32.totalorder %v207, %v215
        %vm268 = vcmp.eq.s32.totalorder %v208, %v214
        %vm269 = vcmp.eq.s32.totalorder %v208, %v215
        %vm270 = vcmp.eq.s32.totalorder %v209, %v214
        %vm271 = vcmp.eq.s32.totalorder %v209, %v215
        %vm272 = vcmp.eq.s32.totalorder %v210, %v214
        %vm273 = vcmp.eq.s32.totalorder %v210, %v215
        %vm274 = vcmp.eq.s32.totalorder %v211, %v214
        %vm275 = vcmp.eq.s32.totalorder %v211, %v215
        %vm276 = vcmp.eq.s32.totalorder %v212, %v214
        %vm277 = vcmp.eq.s32.totalorder %v212, %v215
        %vm278 = vcmp.eq.s32.totalorder %v213, %v214
        %vm279 = vcmp.eq.s32.totalorder %v213, %v215
        %v280 = vsel %vm216, 1, 0
        %v281 = vsel %vm217, 1, 0
        %v282 = vsel %vm218, 1, 0
        %v283 = vsel %vm219, 1, 0
        %v284 = vsel %vm220, 1, 0
        %v285 = vsel %vm221, 1, 0
        %v286 = vsel %vm222, 1, 0
        %v287 = vsel %vm223, 1, 0
        %v288 = vsel %vm224, 1, 0
        %v289 = vsel %vm225, 1, 0
        %v290 = vsel %vm226, 1, 0
        %v291 = vsel %vm227, 1, 0
        %v292 = vsel %vm228, 1, 0
        %v293 = vsel %vm229, 1, 0
        %v294 = vsel %vm230, 1, 0
        %v295 = vsel %vm231, 1, 0
        %v296 = vsel %vm232, 1, 0
        %v297 = vsel %vm233, 1, 0
        %v298 = vsel %vm234, 1, 0
        %v299 = vsel %vm235, 1, 0
        %v300 = vsel %vm236, 1, 0
        %v301 = vsel %vm237, 1, 0
        %v302 = vsel %vm238, 1, 0
        %v303 = vsel %vm239, 1, 0
        %v304 = vsel %vm240, 1, 0
        %v305 = vsel %vm241, 1, 0
        %v306 = vsel %vm242, 1, 0
        %v307 = vsel %vm243, 1, 0
        %v308 = vsel %vm244, 1, 0
        %v309 = vsel %vm245, 1, 0
        %v310 = vsel %vm246, 1, 0
        %v311 = vsel %vm247, 1, 0
        %v312 = vsel %vm248, 1, 0
        %v313 = vsel %vm249, 1, 0
        %v314 = vsel %vm250, 1, 0
        %v315 = vsel %vm251, 1, 0
        %v316 = vsel %vm252, 1, 0
        %v317 = vsel %vm253, 1, 0
        %v318 = vsel %vm254, 1, 0
        %v319 = vsel %vm255, 1, 0
        %v320 = vsel %vm256, 1, 0
        %v321 = vsel %vm257, 1, 0
        %v322 = vsel %vm258, 1, 0
        %v323 = vsel %vm259, 1, 0
        %v324 = vsel %vm260, 1, 0
        %v325 = vsel %vm261, 1, 0
        %v326 = vsel %vm262, 1, 0
        %v327 = vsel %vm263, 1, 0
        %v328 = vsel %vm264, 1, 0
        %v329 = vsel %vm265, 1, 0
        %v330 = vsel %vm266, 1, 0
        %v331 = vsel %vm267, 1, 0
        %v332 = vsel %vm268, 1, 0
        %v333 = vsel %vm269, 1, 0
        %v334 = vsel %vm270, 1, 0
        %v335 = vsel %vm271, 1, 0
        %v336 = vsel %vm272, 1, 0
        %v337 = vsel %vm273, 1, 0
        %v338 = vsel %vm274, 1, 0
        %v339 = vsel %vm275, 1, 0
        %v340 = vsel %vm276, 1, 0
        %v341 = vsel %vm277, 1, 0
        %v342 = vsel %vm278, 1, 0
        %v343 = vsel %vm279, 1, 0
        %v344 = vcvt.s32.f32 %v280
        %v345 = vcvt.s32.f32 %v281
        %v346 = vcvt.s32.f32 %v282
        %v347 = vcvt.s32.f32 %v283
        %v348 = vcvt.s32.f32 %v284
        %v349 = vcvt.s32.f32 %v285
        %v350 = vcvt.s32.f32 %v286
        %v351 = vcvt.s32.f32 %v287
        %v352 = vcvt.s32.f32 %v288
        %v353 = vcvt.s32.f32 %v289
        %v354 = vcvt.s32.f32 %v290
        %v355 = vcvt.s32.f32 %v291
        %v356 = vcvt.s32.f32 %v292
        %v357 = vcvt.s32.f32 %v293
        %v358 = vcvt.s32.f32 %v294
        %v359 = vcvt.s32.f32 %v295
        %v360 = vcvt.s32.f32 %v296
        %v361 = vcvt.s32.f32 %v297
        %v362 = vcvt.s32.f32 %v298
        %v363 = vcvt.s32.f32 %v299
        %v364 = vcvt.s32.f32 %v300
        %v365 = vcvt.s32.f32 %v301
        %v366 = vcvt.s32.f32 %v302
        %v367 = vcvt.s32.f32 %v303
        %v368 = vcvt.s32.f32 %v304
        %v369 = vcvt.s32.f32 %v305
        %v370 = vcvt.s32.f32 %v306
        %v371 = vcvt.s32.f32 %v307
        %v372 = vcvt.s32.f32 %v308
        %v373 = vcvt.s32.f32 %v309
        %v374 = vcvt.s32.f32 %v310
        %v375 = vcvt.s32.f32 %v311
        %v376 = vcvt.s32.f32 %v312
        %v377 = vcvt.s32.f32 %v313
        %v378 = vcvt.s32.f32 %v314
        %v379 = vcvt.s32.f32 %v315
        %v380 = vcvt.s32.f32 %v316
        %v381 = vcvt.s32.f32 %v317
        %v382 = vcvt.s32.f32 %v318
        %v383 = vcvt.s32.f32 %v319
        %v384 = vcvt.s32.f32 %v320
        %v385 = vcvt.s32.f32 %v321
        %v386 = vcvt.s32.f32 %v322
        %v387 = vcvt.s32.f32 %v323
        %v388 = vcvt.s32.f32 %v324
        %v389 = vcvt.s32.f32 %v325
        %v390 = vcvt.s32.f32 %v326
        %v391 = vcvt.s32.f32 %v327
        %v392 = vcvt.s32.f32 %v328
        %v393 = vcvt.s32.f32 %v329
        %v394 = vcvt.s32.f32 %v330
        %v395 = vcvt.s32.f32 %v331
        %v396 = vcvt.s32.f32 %v332
        %v397 = vcvt.s32.f32 %v333
        %v398 = vcvt.s32.f32 %v334
        %v399 = vcvt.s32.f32 %v335
        %v400 = vcvt.s32.f32 %v336
        %v401 = vcvt.s32.f32 %v337
        %v402 = vcvt.s32.f32 %v338
        %v403 = vcvt.s32.f32 %v339
        %v404 = vcvt.s32.f32 %v340
        %v405 = vcvt.s32.f32 %v341
        %v406 = vcvt.s32.f32 %v342
        %v407 = vcvt.s32.f32 %v343
        %v408 = vmul.f32 %v165, 8.0
        %v409 = vfloor.f32 %v408
        %v410 = vcvt.f32.s32.to.zero.pseudo %v409
        %v411 = vcvt.s32.f32 %v410
        %v412 = vsub.f32 %v408, %v411
        %vm413 = vcmp.eq.f32.partialorder %v412, 0.0
        %v414 = vsub.f32 1.0, %v412
        %v415 = vsel %vm413, 0.0, %v414
        %vm416 = vcmp.ge.s32.totalorder %v410, 0
        %vm417 = vcmp.le.s32.totalorder %v410, 8
        %vm418 = vmand %vm416, %vm417
        %v419 = vmul.f32 %v165, %v415
        %v420 = vsel %vm418, %v419, 0.0
        %v421 = vadd.s32 %v410, 1
        %vm422 = vcmp.le.s32.totalorder %v421, 8
        %v423 = vmul.f32 %v165, %v412
        %v424 = vsel %vm422, %v423, 0.0
        %v425 = vmul.u32 %v172, 9
        %vm426 = vcmp.gt.s32.totalorder %v410, 0
        %v427 = vsel %vm426, %v410, 0
        %vm428 = vcmp.lt.s32.totalorder %v427, 8
        %v429 = vsel %vm428, %v427, 8
        %v430 = vadd.s32 %v425, %v429
        %vm431 = vcmp.gt.s32.totalorder %v421, 0
        %v432 = vsel %vm431, %v421, 0
        %vm433 = vcmp.lt.s32.totalorder %v432, 8
        %v434 = vsel %vm433, %v432, 8
        %v435 = vadd.s32 %v425, %v434
        %vm436 = vcmp.gt.f32.partialorder %v165, 0.0
        %vm437 = vcmp.le.f32.partialorder %v165, 0.11111111
        %vm438 = vmand %vm436, %vm437
        %vm439 = vcmp.gt.f32.partialorder %v165, 0.11111111
        %vm440 = vcmp.le.f32.partialorder %v165, 0.22222222
        %vm441 = vmand %vm439, %vm440
        %v442 = vsel %vm441, 1, 0
        %vm443 = vmor %vm438, %vm441
        %vm444 = vcmp.gt.f32.partialorder %v165, 0.22222222
        %vm445 = vcmp.le.f32.partialorder %v165, 0.33333334
        %vm446 = vmand %vm444, %vm445
        %v447 = vsel %vm446, 2, %v442
        %vm448 = vmor %vm443, %vm446
        %vm449 = vcmp.gt.f32.partialorder %v165, 0.33333334
        %vm450 = vcmp.le.f32.partialorder %v165, 0.44444445
        %vm451 = vmand %vm449, %vm450
        %v452 = vsel %vm451, 3, %v447
        %vm453 = vmor %vm448, %vm451
        %vm454 = vcmp.gt.f32.partialorder %v165, 0.44444445
        %vm455 = vcmp.le.f32.partialorder %v165, 0.5555556
        %vm456 = vmand %vm454, %vm455
        %v457 = vsel %vm456, 4, %v452
        %vm458 = vmor %vm453, %vm456
        %vm459 = vcmp.gt.f32.partialorder %v165, 0.5555556
        %vm460 = vcmp.le.f32.partialorder %v165, 0.6666667
        %vm461 = vmand %vm459, %vm460
        %v462 = vsel %vm461, 5, %v457
        %vm463 = vmor %vm458, %vm461
        %vm464 = vcmp.gt.f32.partialorder %v165, 0.6666667
        %vm465 = vcmp.le.f32.partialorder %v165, 0.7777778
        %vm466 = vmand %vm464, %vm465
        %v467 = vsel %vm466, 6, %v462
        %vm468 = vmor %vm463, %vm466
        %vm469 = vcmp.gt.f32.partialorder %v165, 0.7777778
        %vm470 = vcmp.le.f32.partialorder %v165, 0.8888889
        %vm471 = vmand %vm469, %vm470
        %v472 = vsel %vm471, 7, %v467
        %vm473 = vmor %vm468, %vm471
        %vm474 = vcmp.gt.f32.partialorder %v165, 0.8888889
        %vm475 = vcmp.le.f32.partialorder %v165, 1.0
        %vm476 = vmand %vm474, %vm475
        %v477 = vsel %vm476, 8, %v472
        %vm478 = vmor %vm473, %vm476
        %v479 = vadd.s32 %v477, 18
        %v480 = vadd.s32 %v172, 28
        %v481 = vperm.slane %v430, 0
        %v482 = vperm.slane %v430, 1
        %vm483 = vcmp.eq.s32.totalorder %v182, %v481
        %vm484 = vcmp.eq.s32.totalorder %v182, %v482
        %vm485 = vcmp.eq.s32.totalorder %v183, %v481
        %vm486 = vcmp.eq.s32.totalorder %v183, %v482
        %vm487 = vcmp.eq.s32.totalorder %v184, %v481
        %vm488 = vcmp.eq.s32.totalorder %v184, %v482
        %vm489 = vcmp.eq.s32.totalorder %v185, %v481
        %vm490 = vcmp.eq.s32.totalorder %v185, %v482
        %v492 = vperm.slane %v420, 0
        %v493 = vperm.slane %v420, 1
        %v496 = vsel %vm483, %v492, 0.0
        %v497 = vsel %vm484, %v493, 0.0
        %v498 = vsel %vm485, %v492, 0.0
        %v499 = vsel %vm486, %v493, 0.0
        %v500 = vsel %vm487, %v492, 0.0
        %v501 = vsel %vm488, %v493, 0.0
        %v502 = vsel %vm489, %v492, 0.0
        %v503 = vsel %vm490, %v493, 0.0
        %v504 = vperm.slane %v435, 0
        %v505 = vperm.slane %v435, 1
        %vm506 = vcmp.eq.s32.totalorder %v182, %v504
        %vm507 = vcmp.eq.s32.totalorder %v182, %v505
        %vm508 = vcmp.eq.s32.totalorder %v183, %v504
        %vm509 = vcmp.eq.s32.totalorder %v183, %v505
        %vm510 = vcmp.eq.s32.totalorder %v184, %v504
        %vm511 = vcmp.eq.s32.totalorder %v184, %v505
        %vm512 = vcmp.eq.s32.totalorder %v185, %v504
        %vm513 = vcmp.eq.s32.totalorder %v185, %v505
        %v515 = vperm.slane %v424, 0
        %v516 = vperm.slane %v424, 1
        %v519 = vsel %vm506, %v515, 0.0
        %v520 = vsel %vm507, %v516, 0.0
        %v521 = vsel %vm508, %v515, 0.0
        %v522 = vsel %vm509, %v516, 0.0
        %v523 = vsel %vm510, %v515, 0.0
        %v524 = vsel %vm511, %v516, 0.0
        %v525 = vsel %vm512, %v515, 0.0
        %v526 = vsel %vm513, %v516, 0.0
        %v527 = vadd.f32 %v496, %v519
        %v528 = vadd.f32 %v497, %v520
        %v529 = vadd.f32 %v498, %v521
        %v530 = vadd.f32 %v499, %v522
        %v531 = vadd.f32 %v500, %v523
        %v532 = vadd.f32 %v501, %v524
        %v533 = vadd.f32 %v502, %v525
        %v534 = vadd.f32 %v503, %v526
        %v535 = vperm.slane %v479, 0
        %v536 = vperm.slane %v479, 1
        %vm537 = vcmp.eq.s32.totalorder %v182, %v535
        %vm538 = vcmp.eq.s32.totalorder %v182, %v536
        %vm539 = vcmp.eq.s32.totalorder %v183, %v535
        %vm540 = vcmp.eq.s32.totalorder %v183, %v536
        %vm541 = vcmp.eq.s32.totalorder %v184, %v535
        %vm542 = vcmp.eq.s32.totalorder %v184, %v536
        %vm543 = vcmp.eq.s32.totalorder %v185, %v535
        %vm544 = vcmp.eq.s32.totalorder %v185, %v536
        %v545 = vsel %vm478, 1, 0
        %v546 = vperm.slane %v545, 0
        %v547 = vperm.slane %v545, 1
        %vm548 = vcmp.eq.s32.totalorder %v546, 1
        %vm549 = vcmp.eq.s32.totalorder %v547, 1
        %vm550 = vmand %vm537, %vm548
        %vm551 = vmand %vm538, %vm549
        %vm552 = vmand %vm539, %vm548
        %vm553 = vmand %vm540, %vm549
        %vm554 = vmand %vm541, %vm548
        %vm555 = vmand %vm542, %vm549
        %vm556 = vmand %vm543, %vm548
        %vm557 = vmand %vm544, %vm549
        %v558 = vsel %vm550, 1.0, 0.0
        %v559 = vsel %vm551, 1.0, 0.0
        %v560 = vsel %vm552, 1.0, 0.0
        %v561 = vsel %vm553, 1.0, 0.0
        %v562 = vsel %vm554, 1.0, 0.0
        %v563 = vsel %vm555, 1.0, 0.0
        %v564 = vsel %vm556, 1.0, 0.0
        %v565 = vsel %vm557, 1.0, 0.0
        %v566 = vadd.f32 %v527, %v558
        %v567 = vadd.f32 %v528, %v559
        %v568 = vadd.f32 %v529, %v560
        %v569 = vadd.f32 %v530, %v561
        %v570 = vadd.f32 %v531, %v562
        %v571 = vadd.f32 %v532, %v563
        %v572 = vadd.f32 %v533, %v564
        %v573 = vadd.f32 %v534, %v565
        %vm574 = vcmp.eq.s32.totalorder %v182, 27
        %vm575 = vcmp.eq.s32.totalorder %v183, 27
        %vm576 = vcmp.eq.s32.totalorder %v184, 27
        %vm577 = vcmp.eq.s32.totalorder %v185, 27
        %v578 = vsel %vm574, 1, 0
        %v579 = vsel %vm575, 1, 0
        %v580 = vsel %vm576, 1, 0
        %v581 = vsel %vm577, 1, 0
        %v582 = vcvt.s32.f32 %v578
        %v583 = vcvt.s32.f32 %v579
        %v584 = vcvt.s32.f32 %v580
        %v585 = vcvt.s32.f32 %v581
        %v586 = vadd.f32 %v566, %v582
        %v587 = vadd.f32 %v567, %v582
        %v588 = vadd.f32 %v568, %v583
        %v589 = vadd.f32 %v569, %v583
        %v590 = vadd.f32 %v570, %v584
        %v591 = vadd.f32 %v571, %v584
        %v592 = vadd.f32 %v572, %v585
        %v593 = vadd.f32 %v573, %v585
        %v594 = vperm.slane %v480, 0
        %v595 = vperm.slane %v480, 1
        %vm596 = vcmp.eq.s32.totalorder %v182, %v594
        %vm597 = vcmp.eq.s32.totalorder %v182, %v595
        %vm598 = vcmp.eq.s32.totalorder %v183, %v594
        %vm599 = vcmp.eq.s32.totalorder %v183, %v595
        %vm600 = vcmp.eq.s32.totalorder %v184, %v594
        %vm601 = vcmp.eq.s32.totalorder %v184, %v595
        %vm602 = vcmp.eq.s32.totalorder %v185, %v594
        %vm603 = vcmp.eq.s32.totalorder %v185, %v595
        %v604 = vsel %vm596, 1, 0
        %v605 = vsel %vm597, 1, 0
        %v606 = vsel %vm598, 1, 0
        %v607 = vsel %vm599, 1, 0
        %v608 = vsel %vm600, 1, 0
        %v609 = vsel %vm601, 1, 0
        %v610 = vsel %vm602, 1, 0
        %v611 = vsel %vm603, 1, 0
        %v612 = vcvt.s32.f32 %v604
        %v613 = vcvt.s32.f32 %v605
        %v614 = vcvt.s32.f32 %v606
        %v615 = vcvt.s32.f32 %v607
        %v616 = vcvt.s32.f32 %v608
        %v617 = vcvt.s32.f32 %v609
        %v618 = vcvt.s32.f32 %v610
        %v619 = vcvt.s32.f32 %v611
        %v620 = vadd.f32 %v586, %v612
        %v621 = vadd.f32 %v587, %v613
        %v622 = vadd.f32 %v588, %v614
        %v623 = vadd.f32 %v589, %v615
        %v624 = vadd.f32 %v590, %v616
        %v625 = vadd.f32 %v591, %v617
        %v626 = vadd.f32 %v592, %v618
        %v627 = vadd.f32 %v593, %v619
        %v628 = vld [vmem:[#allocation2] sm:$0xff]
        %v629 = vld [vmem:[#allocation2 + $0x8] sm:$0xff]
        %v630 = vld [vmem:[#allocation2 + $0x10] sm:$0xff]
        %v631 = vld [vmem:[#allocation2 + $0x18] sm:$0xff]
        %v632 = vld [vmem:[#allocation2 + $0x20] sm:$0xff]
        %v633 = vld [vmem:[#allocation2 + $0x28] sm:$0xff]
        %v634 = vld [vmem:[#allocation2 + $0x30] sm:$0xff]
        %v635 = vld [vmem:[#allocation2 + $0x38] sm:$0xff]
        %636 = vmatpush.xpose.msra.mxu0 %v374
        %637 = vmatpush.xpose.msra.mxu0 %v372
        %638 = vmatpush.xpose.msra.mxu0 %v370
        %639 = vmatpush.xpose.msra.mxu0 %v368
        %640 = vmatpush.xpose.msra.mxu0 %v366
        %641 = vmatpush.xpose.msra.mxu0 %v364
        %642 = vmatpush.xpose.msra.mxu0 %v362
        %643 = vmatpush.xpose.msra.mxu0 %v360
        %644 = vmatpush.xpose.msra.mxu0 %v358
        %645 = vmatpush.xpose.msra.mxu0 %v356
        %646 = vmatpush.xpose.msra.mxu0 %v354
        %647 = vmatpush.xpose.msra.mxu0 %v352
        %648 = vmatpush.xpose.msra.mxu0 %v350
        %649 = vmatpush.xpose.msra.mxu0 %v348
        %650 = vmatpush.xpose.msra.mxu0 %v346
        %651 = vmatpush.xpose.msra.mxu0 %v344
        %652 = vmatmul.f32.gmra.mxu0 %v620
        %v653 = vpop.f32.mrf.mxu0
        %v654 = vadd.f32 0.0, %v653
        %655 = vmatmul.f32.gmra.mxu0 %v622
        %v656 = vpop.f32.mrf.mxu0
        %v657 = vadd.f32 0.0, %v656
        %658 = vmatmul.f32.gmra.mxu0 %v624
        %v659 = vpop.f32.mrf.mxu0
        %v660 = vadd.f32 0.0, %v659
        %661 = vmatmul.f32.gmra.mxu0 %v626
        %v662 = vpop.f32.mrf.mxu0
        %v663 = vadd.f32 0.0, %v662
        %664 = vdwg.mxu0
        %665 = vmatpush.xpose.msra.mxu0 %v375
        %666 = vmatpush.xpose.msra.mxu0 %v373
        %667 = vmatpush.xpose.msra.mxu0 %v371
        %668 = vmatpush.xpose.msra.mxu0 %v369
        %669 = vmatpush.xpose.msra.mxu0 %v367
        %670 = vmatpush.xpose.msra.mxu0 %v365
        %671 = vmatpush.xpose.msra.mxu0 %v363
        %672 = vmatpush.xpose.msra.mxu0 %v361
        %673 = vmatpush.xpose.msra.mxu0 %v359
        %674 = vmatpush.xpose.msra.mxu0 %v357
        %675 = vmatpush.xpose.msra.mxu0 %v355
        %676 = vmatpush.xpose.msra.mxu0 %v353
        %677 = vmatpush.xpose.msra.mxu0 %v351
        %678 = vmatpush.xpose.msra.mxu0 %v349
        %679 = vmatpush.xpose.msra.mxu0 %v347
        %680 = vmatpush.xpose.msra.mxu0 %v345
        %681 = vmatmul.f32.gmra.mxu0 %v621
        %v682 = vpop.f32.mrf.mxu0
        %v683 = vadd.f32 %v654, %v682
        %684 = vmatmul.f32.gmra.mxu0 %v623
        %v685 = vpop.f32.mrf.mxu0
        %v686 = vadd.f32 %v657, %v685
        %687 = vmatmul.f32.gmra.mxu0 %v625
        %v688 = vpop.f32.mrf.mxu0
        %v689 = vadd.f32 %v660, %v688
        %690 = vmatmul.f32.gmra.mxu0 %v627
        %v691 = vpop.f32.mrf.mxu0
        %v692 = vadd.f32 %v663, %v691
        %693 = vdwg.mxu0
        %694 = vmatpush.xpose.msra.mxu0 %v406
        %695 = vmatpush.xpose.msra.mxu0 %v404
        %696 = vmatpush.xpose.msra.mxu0 %v402
        %697 = vmatpush.xpose.msra.mxu0 %v400
        %698 = vmatpush.xpose.msra.mxu0 %v398
        %699 = vmatpush.xpose.msra.mxu0 %v396
        %700 = vmatpush.xpose.msra.mxu0 %v394
        %701 = vmatpush.xpose.msra.mxu0 %v392
        %702 = vmatpush.xpose.msra.mxu0 %v390
        %703 = vmatpush.xpose.msra.mxu0 %v388
        %704 = vmatpush.xpose.msra.mxu0 %v386
        %705 = vmatpush.xpose.msra.mxu0 %v384
        %706 = vmatpush.xpose.msra.mxu0 %v382
        %707 = vmatpush.xpose.msra.mxu0 %v380
        %708 = vmatpush.xpose.msra.mxu0 %v378
        %709 = vmatpush.xpose.msra.mxu0 %v376
        %710 = vmatmul.f32.gmra.mxu0 %v620
        %v711 = vpop.f32.mrf.mxu0
        %v712 = vadd.f32 0.0, %v711
        %713 = vmatmul.f32.gmra.mxu0 %v622
        %v714 = vpop.f32.mrf.mxu0
        %v715 = vadd.f32 0.0, %v714
        %716 = vmatmul.f32.gmra.mxu0 %v624
        %v717 = vpop.f32.mrf.mxu0
        %v718 = vadd.f32 0.0, %v717
        %719 = vmatmul.f32.gmra.mxu0 %v626
        %v720 = vpop.f32.mrf.mxu0
        %v721 = vadd.f32 0.0, %v720
        %722 = vdwg.mxu0
        %723 = vmatpush.xpose.msra.mxu0 %v407
        %724 = vmatpush.xpose.msra.mxu0 %v405
        %725 = vmatpush.xpose.msra.mxu0 %v403
        %726 = vmatpush.xpose.msra.mxu0 %v401
        %727 = vmatpush.xpose.msra.mxu0 %v399
        %728 = vmatpush.xpose.msra.mxu0 %v397
        %729 = vmatpush.xpose.msra.mxu0 %v395
        %730 = vmatpush.xpose.msra.mxu0 %v393
        %731 = vmatpush.xpose.msra.mxu0 %v391
        %732 = vmatpush.xpose.msra.mxu0 %v389
        %733 = vmatpush.xpose.msra.mxu0 %v387
        %734 = vmatpush.xpose.msra.mxu0 %v385
        %735 = vmatpush.xpose.msra.mxu0 %v383
        %736 = vmatpush.xpose.msra.mxu0 %v381
        %737 = vmatpush.xpose.msra.mxu0 %v379
        %738 = vmatpush.xpose.msra.mxu0 %v377
        %739 = vmatmul.f32.gmra.mxu0 %v621
        %v740 = vpop.f32.mrf.mxu0
        %v741 = vadd.f32 %v712, %v740
        %742 = vmatmul.f32.gmra.mxu0 %v623
        %v743 = vpop.f32.mrf.mxu0
        %v744 = vadd.f32 %v715, %v743
        %745 = vmatmul.f32.gmra.mxu0 %v625
        %v746 = vpop.f32.mrf.mxu0
        %v747 = vadd.f32 %v718, %v746
        %748 = vmatmul.f32.gmra.mxu0 %v627
        %v749 = vpop.f32.mrf.mxu0
        %v750 = vadd.f32 %v721, %v749
        %751 = vdwg.mxu0
        %v752 = vadd.f32 %v628, %v683
        %v753 = vadd.f32 %v629, %v741
        %v754 = vadd.f32 %v630, %v686
        %v755 = vadd.f32 %v631, %v744
        %v756 = vadd.f32 %v632, %v689
        %v757 = vadd.f32 %v633, %v747
        %v758 = vadd.f32 %v634, %v692
        %v759 = vadd.f32 %v635, %v750
        %760 = vst [vmem:[#allocation2] sm:$0xff] %v752
        %761 = vst [vmem:[#allocation2 + $0x8] sm:$0xff] %v753
        %762 = vst [vmem:[#allocation2 + $0x10] sm:$0xff] %v754
        %763 = vst [vmem:[#allocation2 + $0x18] sm:$0xff] %v755
        %764 = vst [vmem:[#allocation2 + $0x20] sm:$0xff] %v756
        %765 = vst [vmem:[#allocation2 + $0x28] sm:$0xff] %v757
        %766 = vst [vmem:[#allocation2 + $0x30] sm:$0xff] %v758
        %767 = vst [vmem:[#allocation2 + $0x38] sm:$0xff] %v759
        %p768 = scmp.eq.s32.totalorder %s23, 1
        // Predicated region
        $region33: #{tpu_custom_call.1} parent=23 // pred_check
          %p769 = pneg %p768
        $region34: #{tpu_custom_call.1} parent=23 // pred_check_branch
          %771 = sbr.rel (%p769) target = $region36
        $region35: #{tpu_custom_call.1} parent=23 // pred_region
          %v772 = vld [vmem:[#allocation2] sm:$0xff]
          %v773 = vld [vmem:[#allocation2 + $0x8] sm:$0xff]
          %v774 = vld [vmem:[#allocation2 + $0x10] sm:$0xff]
          %v775 = vld [vmem:[#allocation2 + $0x18] sm:$0xff]
          %v776 = vld [vmem:[#allocation2 + $0x20] sm:$0xff]
          %v777 = vld [vmem:[#allocation2 + $0x28] sm:$0xff]
          %v778 = vld [vmem:[#allocation2 + $0x30] sm:$0xff]
          %v779 = vld [vmem:[#allocation2 + $0x38] sm:$0xff]
          %vm780 = vcmp.ge.s32.totalorder %v182, 18
          %vm781 = vcmp.ge.s32.totalorder %v183, 18
          %vm782 = vcmp.ge.s32.totalorder %v184, 18
          %vm783 = vcmp.ge.s32.totalorder %v185, 18
          %vm784 = vcmp.lt.s32.totalorder %v182, 27
          %vm785 = vcmp.lt.s32.totalorder %v183, 27
          %vm786 = vcmp.lt.s32.totalorder %v184, 27
          %vm787 = vcmp.lt.s32.totalorder %v185, 27
          %vm788 = vmand %vm780, %vm784
          %vm789 = vmand %vm781, %vm785
          %vm790 = vmand %vm782, %vm786
          %vm791 = vmand %vm783, %vm787
          %vm792 = vcmp.gt.f32.partialorder %v772, 0.0
          %vm793 = vcmp.gt.f32.partialorder %v773, 0.0
          %vm794 = vcmp.gt.f32.partialorder %v774, 0.0
          %vm795 = vcmp.gt.f32.partialorder %v775, 0.0
          %vm796 = vcmp.gt.f32.partialorder %v776, 0.0
          %vm797 = vcmp.gt.f32.partialorder %v777, 0.0
          %vm798 = vcmp.gt.f32.partialorder %v778, 0.0
          %vm799 = vcmp.gt.f32.partialorder %v779, 0.0
          %v800 = vsel %vm792, 1, 0
          %v801 = vsel %vm793, 1, 0
          %v802 = vsel %vm794, 1, 0
          %v803 = vsel %vm795, 1, 0
          %v804 = vsel %vm796, 1, 0
          %v805 = vsel %vm797, 1, 0
          %v806 = vsel %vm798, 1, 0
          %v807 = vsel %vm799, 1, 0
          %v808 = vcvt.s32.f32 %v800
          %v809 = vcvt.s32.f32 %v801
          %v810 = vcvt.s32.f32 %v802
          %v811 = vcvt.s32.f32 %v803
          %v812 = vcvt.s32.f32 %v804
          %v813 = vcvt.s32.f32 %v805
          %v814 = vcvt.s32.f32 %v806
          %v815 = vcvt.s32.f32 %v807
          %v816 = vsel %vm788, %v808, %v772
          %v817 = vsel %vm788, %v809, %v773
          %v818 = vsel %vm789, %v810, %v774
          %v819 = vsel %vm789, %v811, %v775
          %v820 = vsel %vm790, %v812, %v776
          %v821 = vsel %vm790, %v813, %v777
          %v822 = vsel %vm791, %v814, %v778
          %v823 = vsel %vm791, %v815, %v779
          %824 = vst [vmem:[%s146] sm:$0xff] %v816
          %825 = vst [vmem:[%s146 + $0x8] sm:$0xff] %v817
          %826 = vst [vmem:[%s146 + $0x10] sm:$0xff] %v818
          %827 = vst [vmem:[%s146 + $0x18] sm:$0xff] %v819
          %828 = vst [vmem:[%s146 + $0x20] sm:$0xff] %v820
          %829 = vst [vmem:[%s146 + $0x28] sm:$0xff] %v821
          %830 = vst [vmem:[%s146 + $0x30] sm:$0xff] %v822
          %831 = vst [vmem:[%s146 + $0x38] sm:$0xff] %v823
        $region36: #{tpu_custom_call.1} parent=23 // pred_fallthru
          _
        %s832 = sand.u32 %s64, 1
        %s833 = scalar_lea.sflag [#allocation5], %s832
        %s834 = sand.u32 %s64, 1
        %s835 = smul.addr %s834, 64
        %s836 = scalar_lea.vmem [#allocation6], %s835
        // Predicated region
        $region37: #{tpu_custom_call.1} parent=23 // pred_check
          %p837 = pneg %p74
        $region38: #{tpu_custom_call.1} parent=23 // pred_check_branch
          %839 = sbr.rel (%p837) target = $region40
        $region39: #{tpu_custom_call.1} parent=23 // pred_region
          %s840 = smul.u32 2, %s22
          %842 = vsyncadd %s833, 0
          %s843 = smul.addr %s840, 8
          %s844 = scalar_lea.hbm %s1, %s843
          %s845 = sshll.u32 %s836, 4
          %s846 = int_to_ptr.vmem [resolvable:$true] %s845
          %s847 = sshll.u32 %s844, 4
          %s848 = int_to_ptr.hbm [resolvable:$true] %s847
          %853 = dma.vmem_to_hbm [thread:$0]  %s846, 1024, %s848, %s833, 256, 512, 16
        $region40: #{tpu_custom_call.1} parent=23 // pred_fallthru
          _
      $region24: #{tpu_custom_call.1} parent=5 // pred_fallthru
        _
      %p854 = scmp.le.s32.totalorder 2, %s13
      // Predicated region
      $region41: #{tpu_custom_call.1} parent=5 // pred_check
        %p855 = pneg %p854
      $region42: #{tpu_custom_call.1} parent=5 // pred_check_branch
        %857 = sbr.rel (%p855) target = $region44
      $region43: #{tpu_custom_call.1} parent=5 // pred_region
        %s858 = ssub.s32 %s13, 2
        // Predicated region
        $region45: #{tpu_custom_call.1} parent=43 // pred_check
          %p859 = pneg %p80
        $region46: #{tpu_custom_call.1} parent=43 // pred_check_branch
          %861 = sbr.rel (%p859) target = $region48
        $region47: #{tpu_custom_call.1} parent=43 // pred_region
          %s862 = sand.u32 %s65, 1
          %s863 = scalar_lea.sflag [#allocation5], %s862
          %s864 = sand.u32 %s65, 1
          %s865 = smul.addr %s864, 64
          %s866 = scalar_lea.vmem [#allocation6], %s865
          %868 = dma.done %s863, 1024
        $region48: #{tpu_custom_call.1} parent=43 // pred_fallthru
          _
      $region44: #{tpu_custom_call.1} parent=5 // pred_fallthru
        _
    $region6: #{tpu_custom_call.1} parent=1 // loop_footer
      %s17 = sadd.s32 1, %s13
    $region7: #{tpu_custom_call.1} parent=1 // loop_footer_branch
      %12 = sbr.rel target = $region3
    $region8: #{tpu_custom_call.1} parent=1 // loop_exit
      _
    %869 = vsyncpa [#allocation4], 1
    %s870 = scalar_lea.sflag [#allocation4], 1
    %871 = vsyncpa %s870, 1
    %872 = vsyncpa [#allocation5], 1
    %s873 = scalar_lea.sflag [#allocation5], 1
    %874 = vsyncpa %s873, 1

</llo_original>
